<compile_context>
chip_gen: v7x
topology: tpu7x:2x2x1
jax: 0.10.0
libtpu: 0.0.40
codegen_flags: <defaults>
</compile_context>

<pallas_src>
import jax
import jax.numpy as jnp
from jax.experimental import pallas as pl
from jax.experimental.pallas import tpu as pltpu

_VMEM_LIMIT = 32 * 1024 * 1024  # bytes; demo tiles are tiny, raise + re-derive for prod


# ----------------------------------------------------------------------------
# Kernel 1: ConvTranspose2d(kernel=2, stride=2), tap-fused, bf16.
# ----------------------------------------------------------------------------
def _convt2x2_kernel(x_ref, w_ref, b_ref, o_ref):
    # x_ref: (1, H*W, Cin) bf16   w_ref: (2, Cin, 2*Cup) bf16   b_ref: (1, 2*Cup) f32
    # o_ref: (1, H, 2, W, 2*Cup) bf16 with o[0,h,a,w,b*Cup+d] = up[2h+a, 2w+b, d]
    _, H, _, W, C2 = o_ref.shape
    x = x_ref[0]
    for a in range(2):  # one matmul per output-row parity (both tap columns fused)
        y = jnp.dot(x, w_ref[a], preferred_element_type=jnp.float32) + b_ref[...]
        o_ref[0, :, a, :, :] = y.reshape(H, W, C2).astype(o_ref.dtype)


def conv_transpose_2x2_s2(x_nhwc, w, b):
    """x_nhwc: (N,H,W,Cin); w: (Cin,Cout,2,2) [PyTorch IOHW]; b: (Cout,).

    Returns the upsampled map (N, 2H, 2W, Cout) in bf16; the trailing reshape is
    contiguous, so no HBM shuffle is materialized."""
    N, H, W, Cin = x_nhwc.shape
    Cup = w.shape[1]
    xf = x_nhwc.reshape(N, H * W, Cin).astype(jnp.bfloat16)
    # wk[a, c, b*Cup + d] = w[c, d, a, b]
    wk = jnp.transpose(w, (2, 0, 3, 1)).reshape(2, Cin, 2 * Cup).astype(jnp.bfloat16)
    bk = jnp.tile(b, 2).reshape(1, 2 * Cup).astype(jnp.float32)

    out = pl.pallas_call(
        _convt2x2_kernel,
        out_shape=jax.ShapeDtypeStruct((N, H, 2, W, 2 * Cup), jnp.bfloat16),
        grid=(N,),
        in_specs=[
            pl.BlockSpec((1, H * W, Cin), lambda n: (n, 0, 0)),
            pl.BlockSpec((2, Cin, 2 * Cup), lambda n: (0, 0, 0)),
            pl.BlockSpec((1, 2 * Cup), lambda n: (0, 0)),
        ],
        out_specs=pl.BlockSpec((1, H, 2, W, 2 * Cup), lambda n: (n, 0, 0, 0, 0)),
        compiler_params=pltpu.CompilerParams(
            dimension_semantics=("parallel",), vmem_limit_bytes=_VMEM_LIMIT),
    )(xf, wk, bk)
    # (N, H, 2, W, 2*Cup) -> (N, 2H, 2W, Cup): contiguous merge => free reshape.
    return out.reshape(N, 2 * H, 2 * W, Cup)


def _zero_halo_ring(pad_ref):
    """Zero only the 1-px conv halo ring of a (Hp, Wp, C) VMEM scratch.

    The interior is fully rewritten every grid step, so this is all the memset
    needed, and doing it every step keeps it correct even if the parallel grid is
    split across TensorCores (per-core scratch starts uninitialized)."""
    Hp, Wp, C = pad_ref.shape
    zrow = jnp.zeros((1, Wp, C), pad_ref.dtype)
    zcol = jnp.zeros((Hp, 1, C), pad_ref.dtype)
    pad_ref[pl.ds(0, 1), pl.ds(0, Wp), pl.ds(0, C)] = zrow
    pad_ref[pl.ds(Hp - 1, 1), pl.ds(0, Wp), pl.ds(0, C)] = zrow
    pad_ref[pl.ds(0, Hp), pl.ds(0, 1), pl.ds(0, C)] = zcol
    pad_ref[pl.ds(0, Hp), pl.ds(Wp - 1, 1), pl.ds(0, C)] = zcol


def _conv3x3_tap_accumulate(xp, w_ref, b_ref, Ho, Wo):
    """3x3 conv on an already zero-padded (Ho+2, Wo+2, Cin) bf16 map via 9
    tap-accumulated matmuls (no im2col concatenate)."""
    Cin = xp.shape[-1]
    Cmid = w_ref.shape[-1]
    acc = jnp.zeros((Ho * Wo, Cmid), jnp.float32)
    for dh in range(3):
        for dw in range(3):
            tap = jax.lax.slice(xp, (dh, dw, 0), (dh + Ho, dw + Wo, Cin))
            acc = acc + jnp.dot(tap.reshape(Ho * Wo, Cin), w_ref[dh * 3 + dw],
                                preferred_element_type=jnp.float32)
    return acc + b_ref[...]


# ----------------------------------------------------------------------------
# Kernel 2: conv1 3x3 pad=1 over cat([x2, up]); pad + concat assembled once in a
#           single bf16 VMEM scratch; per-image BN partial stats.
# ----------------------------------------------------------------------------
def _conv1_kernel(x2_ref, up_ref, w_ref, b_ref, o_ref, sum_ref, sq_ref, pad_ref):
    # x2_ref : (1, Ho, Wo, Ch) bf16     up_ref : (1, Hu, Wu, Ch) bf16
    # w_ref  : (9, 2*Ch, Cmid) bf16     b_ref  : (1, Cmid) f32
    # o_ref  : (1, Ho*Wo, Cmid) bf16    sum/sq : (1, 1, Cmid) f32
    # pad_ref: (Ho+2, Wo+2, 2*Ch) bf16 scratch (zero-padded concat of [x2 | up])
    _, Ho, Wo, Ch = x2_ref.shape
    _, Hu, Wu, _ = up_ref.shape
    ph = 1 + (Ho - Hu) // 2   # F.pad places the upsampled map at (dh//2, dw//2)
    pw = 1 + (Wo - Wu) // 2

    _zero_halo_ring(pad_ref)
    if (Hu != Ho) or (Wu != Wo):
        # General F.pad case: the up half-channels outside the upsampled window
        # must be zero as well (static-shape branch, usually compiled out).
        pad_ref[pl.ds(1, Ho), pl.ds(1, Wo), pl.ds(Ch, Ch)] = jnp.zeros(
            (Ho, Wo, Ch), pad_ref.dtype)

    # Channel order matches torch.cat([x2, x1_up], dim=1).
    pad_ref[pl.ds(1, Ho), pl.ds(1, Wo), pl.ds(0, Ch)] = x2_ref[0]
    pad_ref[pl.ds(ph, Hu), pl.ds(pw, Wu), pl.ds(Ch, Ch)] = up_ref[0]

    acc = _conv3x3_tap_accumulate(pad_ref[...], w_ref, b_ref, Ho, Wo)
    o_ref[0] = acc.astype(o_ref.dtype)
    # Per-image BatchNorm partial statistics (reduced over the batch in glue).
    sum_ref[0] = jnp.sum(acc, axis=0, keepdims=True)
    sq_ref[0] = jnp.sum(acc * acc, axis=0, keepdims=True)


def conv1_fused(x2_bhwc, up_bhwc, w, b):
    """First DoubleConv conv: 3x3, pad=1 over channel-concat of (x2, up)."""
    N, Ho, Wo, Ch = x2_bhwc.shape
    Cmid, Cin = w.shape[0], w.shape[1]                 # Cin == 2*Ch
    Hu, Wu = up_bhwc.shape[1], up_bhwc.shape[2]
    # wk[dh*3+dw, ci, co] = w[co, ci, dh, dw]
    wk = jnp.transpose(w, (2, 3, 1, 0)).reshape(9, Cin, Cmid).astype(jnp.bfloat16)
    bk = b.reshape(1, Cmid).astype(jnp.float32)

    c1, psum, psq = pl.pallas_call(
        _conv1_kernel,
        out_shape=(
            jax.ShapeDtypeStruct((N, Ho * Wo, Cmid), jnp.bfloat16),
            jax.ShapeDtypeStruct((N, 1, Cmid), jnp.float32),
            jax.ShapeDtypeStruct((N, 1, Cmid), jnp.float32),
        ),
        grid=(N,),
        in_specs=[
            pl.BlockSpec((1, Ho, Wo, Ch), lambda n: (n, 0, 0, 0)),
            pl.BlockSpec((1, Hu, Wu, Ch), lambda n: (n, 0, 0, 0)),
            pl.BlockSpec((9, Cin, Cmid), lambda n: (0, 0, 0)),
            pl.BlockSpec((1, Cmid), lambda n: (0, 0)),
        ],
        out_specs=(
            pl.BlockSpec((1, Ho * Wo, Cmid), lambda n: (n, 0, 0)),
            pl.BlockSpec((1, 1, Cmid), lambda n: (n, 0, 0)),
            pl.BlockSpec((1, 1, Cmid), lambda n: (n, 0, 0)),
        ),
        scratch_shapes=[pltpu.VMEM((Ho + 2, Wo + 2, Cin), jnp.bfloat16)],
        compiler_params=pltpu.CompilerParams(
            dimension_semantics=("parallel",), vmem_limit_bytes=_VMEM_LIMIT),
    )(x2_bhwc, up_bhwc, wk, bk)
    return c1, jnp.sum(psum, axis=(0, 1)), jnp.sum(psq, axis=(0, 1))


# ----------------------------------------------------------------------------
# Kernel 3: conv2 3x3 pad=1 with fused BatchNorm1 + ReLU prologue and BN2 stats.
# ----------------------------------------------------------------------------
def _conv2_kernel(c1_ref, sc_ref, sh_ref, w_ref, b_ref, o_ref, sum_ref, sq_ref,
                  pad_ref):
    # c1_ref : (1, Ho*Wo, Cmid) bf16 (raw conv1 output, pre-BN)
    # sc/sh  : (1, Cmid) f32 folded BatchNorm1 scale / shift
    # w_ref  : (9, Cmid, Cout) bf16    b_ref : (1, Cout) f32
    # pad_ref: (Ho+2, Wo+2, Cmid) bf16 scratch (post-activation zero padding)
    Hp, Wp, Cmid = pad_ref.shape
    Ho, Wo = Hp - 2, Wp - 2

    _zero_halo_ring(pad_ref)

    # Fused BN1 + ReLU prologue: removes one activation HBM round trip.
    a1 = jnp.maximum(c1_ref[0].astype(jnp.float32) * sc_ref[...] + sh_ref[...], 0.0)
    pad_ref[pl.ds(1, Ho), pl.ds(1, Wo), pl.ds(0, Cmid)] = (
        a1.reshape(Ho, Wo, Cmid).astype(pad_ref.dtype))

    acc = _conv3x3_tap_accumulate(pad_ref[...], w_ref, b_ref, Ho, Wo)
    o_ref[0] = acc.astype(o_ref.dtype)
    sum_ref[0] = jnp.sum(acc, axis=0, keepdims=True)
    sq_ref[0] = jnp.sum(acc * acc, axis=0, keepdims=True)


def conv2_fused(c1_flat, sc1, sh1, Ho, Wo, w, b):
    N, HW, Cmid = c1_flat.shape
    Cout = w.shape[0]
    wk = jnp.transpose(w, (2, 3, 1, 0)).reshape(9, Cmid, Cout).astype(jnp.bfloat16)
    bk = b.reshape(1, Cout).astype(jnp.float32)

    c2, psum, psq = pl.pallas_call(
        _conv2_kernel,
        out_shape=(
            jax.ShapeDtypeStruct((N, HW, Cout), jnp.bfloat16),
            jax.ShapeDtypeStruct((N, 1, Cout), jnp.float32),
            jax.ShapeDtypeStruct((N, 1, Cout), jnp.float32),
        ),
        grid=(N,),
        in_specs=[
            pl.BlockSpec((1, HW, Cmid), lambda n: (n, 0, 0)),
            pl.BlockSpec((1, Cmid), lambda n: (0, 0)),
            pl.BlockSpec((1, Cmid), lambda n: (0, 0)),
            pl.BlockSpec((9, Cmid, Cout), lambda n: (0, 0, 0)),
            pl.BlockSpec((1, Cout), lambda n: (0, 0)),
        ],
        out_specs=(
            pl.BlockSpec((1, HW, Cout), lambda n: (n, 0, 0)),
            pl.BlockSpec((1, 1, Cout), lambda n: (n, 0, 0)),
            pl.BlockSpec((1, 1, Cout), lambda n: (n, 0, 0)),
        ),
        scratch_shapes=[pltpu.VMEM((Ho + 2, Wo + 2, Cmid), jnp.bfloat16)],
        compiler_params=pltpu.CompilerParams(
            dimension_semantics=("parallel",), vmem_limit_bytes=_VMEM_LIMIT),
    )(c1_flat, sc1.reshape(1, Cmid), sh1.reshape(1, Cmid), wk, bk)
    return c2, jnp.sum(psum, axis=(0, 1)), jnp.sum(psq, axis=(0, 1))


# ----------------------------------------------------------------------------
# Kernel 4: apply folded BatchNorm2 (scale/shift) + ReLU elementwise.
# ----------------------------------------------------------------------------
def _bn_relu_kernel(x_ref, sc_ref, sh_ref, o_ref):
    y = x_ref[...].astype(jnp.float32) * sc_ref[...] + sh_ref[...]
    o_ref[...] = jnp.maximum(y, 0.0).astype(o_ref.dtype)


def bn_relu(x_flat, scale, shift):
    N, HW, C = x_flat.shape
    return pl.pallas_call(
        _bn_relu_kernel,
        out_shape=jax.ShapeDtypeStruct((N, HW, C), jnp.float32),
        grid=(N,),
        in_specs=[
            pl.BlockSpec((1, HW, C), lambda n: (n, 0, 0)),
            pl.BlockSpec((1, C), lambda n: (0, 0)),
            pl.BlockSpec((1, C), lambda n: (0, 0)),
        ],
        out_specs=pl.BlockSpec((1, HW, C), lambda n: (n, 0, 0)),
        compiler_params=pltpu.CompilerParams(
            dimension_semantics=("parallel",), vmem_limit_bytes=_VMEM_LIMIT),
    )(x_flat, scale.reshape(1, C), shift.reshape(1, C))


def _bn_scale_shift(s, ss, count, gamma, beta, eps=1e-5):
    # NOTE: sum / sum-of-squares variance in f32; fine at these sizes.  For very
    # large N*H*W a two-pass / centered accumulation would be more robust.
    mean = s / count
    var = jnp.maximum(ss / count - mean * mean, 0.0)  # biased var (training mode)
    scale = gamma / jnp.sqrt(var + eps)
    shift = beta - mean * scale
    return scale, shift


# ----------------------------------------------------------------------------
# UpScaling module: params + forward
# ----------------------------------------------------------------------------
def init_upscaling_params(key, in_channel, out_channel):
    mid = out_channel  # DoubleConv default: mid_channel = out_channel
    half = in_channel // 2
    ks = jax.random.split(key, 6)
    return {
        # ConvTranspose2d(in_channel, in_channel//2, k=2, s=2): weight (in, out, 2, 2)
        "up_w": jax.random.normal(ks[0], (in_channel, half, 2, 2), jnp.float32) * 0.1,
        "up_b": jax.random.normal(ks[1], (half,), jnp.float32) * 0.1,
        # Conv2d(in_channel, mid, 3, pad=1): weight (out, in, 3, 3)
        "c1_w": jax.random.normal(ks[2], (mid, in_channel, 3, 3), jnp.float32) * 0.1,
        "c1_b": jax.random.normal(ks[3], (mid,), jnp.float32) * 0.1,
        "bn1_g": jnp.ones((mid,), jnp.float32),
        "bn1_b": jnp.zeros((mid,), jnp.float32),
        # Conv2d(mid, out_channel, 3, pad=1)
        "c2_w": jax.random.normal(ks[4], (out_channel, mid, 3, 3), jnp.float32) * 0.1,
        "c2_b": jax.random.normal(ks[5], (out_channel,), jnp.float32) * 0.1,
        "bn2_g": jnp.ones((out_channel,), jnp.float32),
        "bn2_b": jnp.zeros((out_channel,), jnp.float32),
    }


def upscaling_forward(params, x1_nchw, x2_nchw):
    # NCHW (PyTorch convention) -> NHWC for the kernels; inputs fed as bf16
    # (matmul operands are bf16 anyway, so this just halves the HBM reads).
    x1 = jnp.transpose(x1_nchw, (0, 2, 3, 1))
    x2 = jnp.transpose(x2_nchw, (0, 2, 3, 1)).astype(jnp.bfloat16)

    # x1 = self.upscaling(x1)   (bf16 intermediate, contiguous free reshape)
    up = conv_transpose_2x2_s2(x1, params["up_w"], params["up_b"])

    N, Ho, Wo, _ = x2.shape
    count = N * Ho * Wo

    # DoubleConv, with F.pad + channel-concat folded into conv1 and BN1 + ReLU
    # folded into conv2.  BatchNorm is training-mode (batch statistics).
    c1, s1, ss1 = conv1_fused(x2, up, params["c1_w"], params["c1_b"])
    sc1, sh1 = _bn_scale_shift(s1, ss1, count, params["bn1_g"], params["bn1_b"])

    c2, s2, ss2 = conv2_fused(c1, sc1, sh1, Ho, Wo, params["c2_w"], params["c2_b"])
    sc2, sh2 = _bn_scale_shift(s2, ss2, count, params["bn2_g"], params["bn2_b"])

    out = bn_relu(c2, sc2, sh2)                        # (N, Ho*Wo, Cout) f32
    Cout = out.shape[-1]
    return jnp.transpose(out.reshape(N, Ho, Wo, Cout), (0, 3, 1, 2))  # NCHW


# ----------------------------------------------------------------------------
# Pure-JAX reference (NCHW, mirrors PyTorch semantics) for validation
# ----------------------------------------------------------------------------
def reference_forward(params, x1, x2, eps=1e-5):
    w = params["up_w"]
    N, _, H, W = x1.shape
    Cout = w.shape[1]
    up = jnp.einsum("ncij,cdab->ndiajb", x1, w).reshape(N, Cout, 2 * H, 2 * W)
    up = up + params["up_b"][None, :, None, None]
    dh = x2.shape[2] - up.shape[2]
    dw = x2.shape[3] - up.shape[3]
    up = jnp.pad(up, ((0, 0), (0, 0), (dh // 2, dh - dh // 2), (dw // 2, dw - dw // 2)))
    x = jnp.concatenate([x2, up], axis=1)

    def conv_bn_relu(x, w, b, g, beta):
        y = jax.lax.conv_general_dilated(
            x, w, window_strides=(1, 1), padding=((1, 1), (1, 1)),
            dimension_numbers=("NCHW", "OIHW", "NCHW"))
        y = y + b[None, :, None, None]
        mean = jnp.mean(y, axis=(0, 2, 3), keepdims=True)
        var = jnp.mean((y - mean) ** 2, axis=(0, 2, 3), keepdims=True)
        y = (y - mean) / jnp.sqrt(var + eps)
        y = y * g[None, :, None, None] + beta[None, :, None, None]
        return jnp.maximum(y, 0.0)

    x = conv_bn_relu(x, params["c1_w"], params["c1_b"], params["bn1_g"], params["bn1_b"])
    x = conv_bn_relu(x, params["c2_w"], params["c2_b"], params["bn2_g"], params["bn2_b"])
    return x


if __name__ == "__main__":
    key = jax.random.PRNGKey(0)
    k1, k2, kp = jax.random.split(key, 3)

    in_channel, out_channel = 8, 4
    N, H, W = 2, 8, 8
    # coarse feature map and skip connection (UNet decoder step)
    x1 = jax.random.normal(k1, (N, in_channel, H, W), jnp.float32)
    x2 = jax.random.normal(k2, (N, in_channel // 2, 2 * H, 2 * W), jnp.float32)

    params = init_upscaling_params(kp, in_channel, out_channel)

    out = upscaling_forward(params, x1, x2)
    out = jax.block_until_ready(out)

    ref = reference_forward(params, x1, x2)
    assert out.shape == ref.shape == (N, out_channel, 2 * H, 2 * W)
    # bf16 matmul operands + bf16 intermediate activations -> relaxed tolerance.
    assert jnp.allclose(out, ref, rtol=5e-2, atol=5e-2), float(jnp.max(jnp.abs(out - ref)))
    print("KERNEL_OK")
</pallas_src>

<mosaic_0001>
module attributes {stable_mosaic.version = 11 : i64} {
  func.func @_convt2x2_kernel(%arg0: i32, %arg1: memref<1x64x8xbf16, #tpu.memory_space<vmem>>, %arg2: memref<2x8x8xbf16, #tpu.memory_space<vmem>>, %arg3: memref<1x8xf32, #tpu.memory_space<vmem>>, %arg4: memref<1x8x2x8x8xbf16, #tpu.memory_space<vmem>>) attributes {dimension_semantics = [#tpu.dimension_semantics<parallel>], iteration_bounds = array<i64: 2>, scalar_prefetch = 0 : i64, scratch_operands = 0 : i64, tpu.core_type = #tpu.core_type<tc>, window_params = [{transform_indices = @transform_0, window_bounds = array<i64: 1, 64, 8>}, {pipeline_mode = #tpu.pipeline_mode<synchronous>, transform_indices = @transform_1, window_bounds = array<i64: 2, 8, 8>}, {pipeline_mode = #tpu.pipeline_mode<synchronous>, transform_indices = @transform_2, window_bounds = array<i64: 1, 8>}, {transform_indices = @transform_3, window_bounds = array<i64: 1, 8, 2, 8, 8>}]} {
    %c0 = arith.constant 0 : index
    %c0_0 = arith.constant 0 : index
    %c0_1 = arith.constant 0 : index
    %0 = vector.load %arg1[%c0, %c0_0, %c0_1] : memref<1x64x8xbf16, #tpu.memory_space<vmem>>, vector<1x64x8xbf16>
    %1 = vector.shape_cast %0 : vector<1x64x8xbf16> to vector<64x8xbf16>
    %c0_2 = arith.constant 0 : index
    %c0_3 = arith.constant 0 : index
    %c0_4 = arith.constant 0 : index
    %2 = vector.load %arg2[%c0_2, %c0_3, %c0_4] : memref<2x8x8xbf16, #tpu.memory_space<vmem>>, vector<1x8x8xbf16>
    %3 = vector.shape_cast %2 : vector<1x8x8xbf16> to vector<8x8xbf16>
    %cst = arith.constant dense<0.000000e+00> : vector<64x8xf32>
    %4 = tpu.matmul %1, %3, %cst {dimension_numbers = #tpu.dot_dimension_numbers<[1], [0], [0], [1], [0, 0, 1, 1], [], []>} : vector<64x8xbf16>, vector<8x8xbf16>, vector<64x8xf32> -> vector<64x8xf32>
    %c0_5 = arith.constant 0 : index
    %c0_6 = arith.constant 0 : index
    %5 = vector.load %arg3[%c0_5, %c0_6] : memref<1x8xf32, #tpu.memory_space<vmem>>, vector<1x8xf32>
    %6 = vector.broadcast %5 : vector<1x8xf32> to vector<64x8xf32>
    %7 = arith.addf %4, %6 : vector<64x8xf32>
    %8 = vector.shape_cast %7 : vector<64x8xf32> to vector<8x8x8xf32>
    %9 = arith.truncf %8 : vector<8x8x8xf32> to vector<8x8x8xbf16>
    %c0_7 = arith.constant 0 : index
    %c0_8 = arith.constant 0 : index
    %c0_9 = arith.constant 0 : index
    %c0_10 = arith.constant 0 : index
    %c0_11 = arith.constant 0 : index
    %10 = vector.load %arg4[%c0_7, %c0_8, %c0_9, %c0_10, %c0_11] : memref<1x8x2x8x8xbf16, #tpu.memory_space<vmem>>, vector<1x8x1x8x8xbf16>
    %11 = vector.shape_cast %10 : vector<1x8x1x8x8xbf16> to vector<8x8x8xbf16>
    %12 = vector.shape_cast %9 : vector<8x8x8xbf16> to vector<1x8x1x8x8xbf16>
    tpu.vector_store %arg4[%c0_7, %c0_8, %c0_9, %c0_10, %c0_11], %12 {strides = array<i32>} : memref<1x8x2x8x8xbf16, #tpu.memory_space<vmem>>, vector<1x8x1x8x8xbf16>,
    %c1 = arith.constant 1 : index
    %c0_12 = arith.constant 0 : index
    %c0_13 = arith.constant 0 : index
    %13 = vector.load %arg2[%c1, %c0_12, %c0_13] : memref<2x8x8xbf16, #tpu.memory_space<vmem>>, vector<1x8x8xbf16>
    %14 = vector.shape_cast %13 : vector<1x8x8xbf16> to vector<8x8xbf16>
    %cst_14 = arith.constant dense<0.000000e+00> : vector<64x8xf32>
    %15 = tpu.matmul %1, %14, %cst_14 {dimension_numbers = #tpu.dot_dimension_numbers<[1], [0], [0], [1], [0, 0, 1, 1], [], []>} : vector<64x8xbf16>, vector<8x8xbf16>, vector<64x8xf32> -> vector<64x8xf32>
    %c0_15 = arith.constant 0 : index
    %c0_16 = arith.constant 0 : index
    %16 = vector.load %arg3[%c0_15, %c0_16] : memref<1x8xf32, #tpu.memory_space<vmem>>, vector<1x8xf32>
    %17 = vector.broadcast %16 : vector<1x8xf32> to vector<64x8xf32>
    %18 = arith.addf %15, %17 : vector<64x8xf32>
    %19 = vector.shape_cast %18 : vector<64x8xf32> to vector<8x8x8xf32>
    %20 = arith.truncf %19 : vector<8x8x8xf32> to vector<8x8x8xbf16>
    %c0_17 = arith.constant 0 : index
    %c0_18 = arith.constant 0 : index
    %c1_19 = arith.constant 1 : index
    %c0_20 = arith.constant 0 : index
    %c0_21 = arith.constant 0 : index
    %21 = vector.load %arg4[%c0_17, %c0_18, %c1_19, %c0_20, %c0_21] : memref<1x8x2x8x8xbf16, #tpu.memory_space<vmem>>, vector<1x8x1x8x8xbf16>
    %22 = vector.shape_cast %21 : vector<1x8x1x8x8xbf16> to vector<8x8x8xbf16>
    %23 = vector.shape_cast %20 : vector<8x8x8xbf16> to vector<1x8x1x8x8xbf16>
    tpu.vector_store %arg4[%c0_17, %c0_18, %c1_19, %c0_20, %c0_21], %23 {strides = array<i32>} : memref<1x8x2x8x8xbf16, #tpu.memory_space<vmem>>, vector<1x8x1x8x8xbf16>,
    return
  }
  func.func @transform_0(%arg0: i32) -> (i32, i32, i32) {
    %c0_i32 = arith.constant 0 : i32
    %c0_i32_0 = arith.constant 0 : i32
    %c0_i32_1 = arith.constant 0 : i32
    return %arg0, %c0_i32, %c0_i32_0 : i32, i32, i32
  }
  func.func @transform_1(%arg0: i32) -> (i32, i32, i32) {
    %c0_i32 = arith.constant 0 : i32
    %c0_i32_0 = arith.constant 0 : i32
    %c0_i32_1 = arith.constant 0 : i32
    %c0_i32_2 = arith.constant 0 : i32
    return %c0_i32, %c0_i32_0, %c0_i32_1 : i32, i32, i32
  }
  func.func @transform_2(%arg0: i32) -> (i32, i32) {
    %c0_i32 = arith.constant 0 : i32
    %c0_i32_0 = arith.constant 0 : i32
    %c0_i32_1 = arith.constant 0 : i32
    return %c0_i32, %c0_i32_0 : i32, i32
  }
  func.func @transform_3(%arg0: i32) -> (i32, i32, i32, i32, i32) {
    %c0_i32 = arith.constant 0 : i32
    %c0_i32_0 = arith.constant 0 : i32
    %c0_i32_1 = arith.constant 0 : i32
    %c0_i32_2 = arith.constant 0 : i32
    %c0_i32_3 = arith.constant 0 : i32
    return %arg0, %c0_i32, %c0_i32_0, %c0_i32_1, %c0_i32_2 : i32, i32, i32, i32, i32
  }
}

</mosaic_0001>

<llo_original>
// kernel: tpu_custom_call.1
$region0: #{tpu_custom_call.1}
  #allocation0 [shape = 'u32[]', space=smem, size = 0x4, offset = 0x4, fixed_abs, tag = 'smem constant byte address 0x4 - core index']
  #allocation1 [shape = 'u32[144,128]{1,0:T(1,128)}', space=vmem, size = 0x12000, scoped, tag = 'internal scratch']
  %s0 = inlined_call_operand.vmem [shape: bf16[2,64,8], index: 0, kind: input, shape index: {}]
  %s1 = inlined_call_operand.vmem [shape: bf16[2,8,8], index: 1, kind: input, shape index: {}]
  %s2 = inlined_call_operand.vmem [shape: f32[1,8], index: 2, kind: input, shape index: {}]
  %s3 = inlined_call_operand.hbm [shape: bf16[2,8,2,8,8], index: 3, kind: output, shape index: {}]
  %s4 = sld [smem:[#allocation0]]
  $region45: #{tpu_custom_call.1} parent=0
    _
  %s6 = ssub.s32 1, %s4
  %s7 = scalar_select 0, %s6, %s4
  $region1: #{tpu_custom_call.1} parent=0
    #allocation2 [shape = 'u8[65536]{0}', space=vmem, size = 0x10000, scoped, tag = 'output window, operand 0']
    #allocation3 [shape = 's32[2]{0}', space=sflag, size = 0x8, scoped, tag = 'scoped memory for tpu_custom_call.1']
    %8 = vsyncpa [#allocation3], 0
    %s9 = scalar_lea.sflag [#allocation3], 1
    %10 = vsyncpa %s9, 0
    loop: start=0, step=1, limit=4
    $region2: #{tpu_custom_call.1} parent=1 // loop_pre_header
      _
    $region3: #{tpu_custom_call.1} parent=1 // loop_header
      %s12 = sphi 0, %s16
      %p13 = scmp.ge.s32.totalorder %s12, 4
      %s22 = sphi 0, %s24
      %s25 = sphi 0, %s22
      %s26 = sphi 0, %s25
      %s42 = sphi 0, %s26
      %s46 = sphi 0, %s46
      %s48 = sphi 0, %s46
      %s49 = sphi 0, %s48
      %s63 = sphi 0, %s49
      %s67 = sphi 0, %s67
      %s69 = sphi 0, %s67
      %s70 = sphi 0, %s69
      %s84 = sphi 0, %s70
      %s90 = sphi 0, %s92
      %s93 = sphi 0, %s90
      %s94 = sphi 0, %s93
      %s110 = sphi 0, %s94
    $region4: #{tpu_custom_call.1} parent=1 // loop_header_branch
      %15 = sbr.rel (%p13) target = $region8
    $region5: #{tpu_custom_call.1} parent=1 // loop_body
      %s17 = ssub.s32 %s12, 1
      %s18 = ssub.s32 %s12, 2
      %s19 = sadd.s32 %s12, 1
      %s20 = ssub.s32 %s12, %s19
      %p21 = scmp.eq.s32.totalorder %s20, 0
      %s23 = sadd.s32 %s22, 1
      %s24 = scalar_select %p21, %s22, %s23
      %p27 = pneg %p21
      %p28 = scmp.eq.s32.totalorder %s12, 1
      %p29 = por %p27, %p28
      %p30 = scmp.ne.s32.totalorder %s22, %s25
      %p31 = scmp.eq.s32.totalorder %s12, 0
      %p32 = por %p30, %p31
      %p33 = scmp.ne.s32.totalorder %s22, %s25
      %p34 = scmp.eq.s32.totalorder %s17, 1
      %p35 = por %p33, %p34
      %p36 = scmp.ne.s32.totalorder %s25, %s26
      %p37 = scmp.eq.s32.totalorder %s17, 0
      %p38 = por %p36, %p37
      %p39 = scmp.ne.s32.totalorder %s25, %s26
      %p40 = scmp.eq.s32.totalorder %s18, 1
      %p41 = por %p39, %p40
      %p43 = scmp.ne.s32.totalorder %s26, %s42
      %p44 = scmp.eq.s32.totalorder %s18, 0
      %p45 = por %p43, %p44
      %s47 = sadd.s32 %s46, 1
      %p50 = scmp.eq.s32.totalorder %s12, 1
      %p51 = scmp.ne.s32.totalorder %s46, %s48
      %p52 = scmp.eq.s32.totalorder %s12, 0
      %p53 = por %p51, %p52
      %p54 = scmp.ne.s32.totalorder %s46, %s48
      %p55 = scmp.eq.s32.totalorder %s17, 1
      %p56 = por %p54, %p55
      %p57 = scmp.ne.s32.totalorder %s48, %s49
      %p58 = scmp.eq.s32.totalorder %s17, 0
      %p59 = por %p57, %p58
      %p60 = scmp.ne.s32.totalorder %s48, %s49
      %p61 = scmp.eq.s32.totalorder %s18, 1
      %p62 = por %p60, %p61
      %p64 = scmp.ne.s32.totalorder %s49, %s63
      %p65 = scmp.eq.s32.totalorder %s18, 0
      %p66 = por %p64, %p65
      %s68 = sadd.s32 %s67, 1
      %p71 = scmp.eq.s32.totalorder %s12, 1
      %p72 = scmp.ne.s32.totalorder %s67, %s69
      %p73 = scmp.eq.s32.totalorder %s12, 0
      %p74 = por %p72, %p73
      %p75 = scmp.ne.s32.totalorder %s67, %s69
      %p76 = scmp.eq.s32.totalorder %s17, 1
      %p77 = por %p75, %p76
      %p78 = scmp.ne.s32.totalorder %s69, %s70
      %p79 = scmp.eq.s32.totalorder %s17, 0
      %p80 = por %p78, %p79
      %p81 = scmp.ne.s32.totalorder %s69, %s70
      %p82 = scmp.eq.s32.totalorder %s18, 1
      %p83 = por %p81, %p82
      %p85 = scmp.ne.s32.totalorder %s70, %s84
      %p86 = scmp.eq.s32.totalorder %s18, 0
      %p87 = por %p85, %p86
      %s88 = ssub.s32 %s12, %s19
      %p89 = scmp.eq.s32.totalorder %s88, 0
      %s91 = sadd.s32 %s90, 1
      %s92 = scalar_select %p89, %s90, %s91
      %p95 = pneg %p89
      %p96 = scmp.eq.s32.totalorder %s12, 1
      %p97 = por %p95, %p96
      %p98 = scmp.ne.s32.totalorder %s90, %s93
      %p99 = scmp.eq.s32.totalorder %s12, 0
      %p100 = por %p98, %p99
      %p101 = scmp.ne.s32.totalorder %s90, %s93
      %p102 = scmp.eq.s32.totalorder %s17, 1
      %p103 = por %p101, %p102
      %p104 = scmp.ne.s32.totalorder %s93, %s94
      %p105 = scmp.eq.s32.totalorder %s17, 0
      %p106 = por %p104, %p105
      %p107 = scmp.ne.s32.totalorder %s93, %s94
      %p108 = scmp.eq.s32.totalorder %s18, 1
      %p109 = por %p107, %p108
      %p111 = scmp.ne.s32.totalorder %s94, %s110
      %p112 = scmp.eq.s32.totalorder %s18, 0
      %p113 = por %p111, %p112
      %p114 = scmp.le.s32.totalorder 1, %s12
      %p115 = scmp.lt.s32.totalorder %s12, 3
      %p116 = pnand %p114, %p115
      %p117 = pneg %p116
      // Predicated region
      $region9: #{tpu_custom_call.1} parent=5 // pred_check
        _
      $region10: #{tpu_custom_call.1} parent=5 // pred_check_branch
        %119 = sbr.rel (%p116) target = $region12
      $region11: #{tpu_custom_call.1} parent=5 // pred_region
        %s120 = ssub.s32 %s12, 1
        // Predicated region
        $region13: #{tpu_custom_call.1} parent=11 // pred_check
          %p121 = pneg %p59
        $region14: #{tpu_custom_call.1} parent=11 // pred_check_branch
          %123 = sbr.rel (%p121) target = $region16
        $region15: #{tpu_custom_call.1} parent=11 // pred_region
          _
        $region16: #{tpu_custom_call.1} parent=11 // pred_fallthru
          _
        // Predicated region
        $region17: #{tpu_custom_call.1} parent=11 // pred_check
          %p124 = pneg %p80
        $region18: #{tpu_custom_call.1} parent=11 // pred_check_branch
          %126 = sbr.rel (%p124) target = $region20
        $region19: #{tpu_custom_call.1} parent=11 // pred_region
          _
        $region20: #{tpu_custom_call.1} parent=11 // pred_fallthru
          _
      $region12: #{tpu_custom_call.1} parent=5 // pred_fallthru
        _
      %p127 = scmp.lt.s32.totalorder %s12, 2
      // Predicated region
      $region21: #{tpu_custom_call.1} parent=5 // pred_check
        %p128 = pneg %p127
      $region22: #{tpu_custom_call.1} parent=5 // pred_check_branch
        %130 = sbr.rel (%p128) target = $region24
      $region23: #{tpu_custom_call.1} parent=5 // pred_region
        // Predicated region
        $region25: #{tpu_custom_call.1} parent=23 // pred_check
          %p131 = pneg %p32
        $region26: #{tpu_custom_call.1} parent=23 // pred_check_branch
          %133 = sbr.rel (%p131) target = $region28
        $region27: #{tpu_custom_call.1} parent=23 // pred_region
          %p134 = scmp.lt.s32.totalorder %s12, 1
          %s135 = scalar_select %p134, %s12, 1
          %s136 = smul.addr %s135, 8
          %s137 = smul.addr %s136, 4
          %s138 = scalar_lea.vmem %s0, %s137
        $region28: #{tpu_custom_call.1} parent=23 // pred_fallthru
          _
      $region24: #{tpu_custom_call.1} parent=5 // pred_fallthru
        _
      %p139 = scmp.le.s32.totalorder 1, %s12
      %p140 = scmp.lt.s32.totalorder %s12, 3
      %p141 = pnand %p139, %p140
      %p142 = pneg %p141
      // Predicated region
      $region29: #{tpu_custom_call.1} parent=5 // pred_check
        _
      $region30: #{tpu_custom_call.1} parent=5 // pred_check_branch
        %144 = sbr.rel (%p141) target = $region32
      $region31: #{tpu_custom_call.1} parent=5 // pred_region
        %s145 = ssub.s32 %s12, 1
        %p146 = scmp.lt.s32.totalorder %s17, 1
        %s147 = scalar_select %p146, %s17, 1
        %s148 = smul.addr %s147, 8
        %s149 = smul.addr %s148, 4
        %s150 = scalar_lea.vmem %s0, %s149
        %p151 = pneg %p38
        %p152 = pneg %p35
        %p153 = pneg %p59
        %p154 = pneg %p56
        %p155 = pneg %p80
        %p156 = pneg %p77
        %p157 = pneg %p106
        %p158 = pneg %p103
        %s159 = sand.u32 %s93, 1
        %s160 = scalar_lea.sflag [#allocation3], %s159
        %s161 = sand.u32 %s93, 1
        %s162 = smul.addr %s161, 64
        %s163 = scalar_lea.vmem [#allocation2], %s162
        %p164 = scmp.lt.s32.totalorder %s17, 1
        %s165 = scalar_select %p164, %s17, 1
        %s166 = smul.addr %s165, 8
        %s167 = smul.addr %s166, 4
        %s168 = scalar_lea.vmem %s0, %s167
        %v170 = vld [vmem:[%s168] sm:$0xf]
        %v171 = vld [vmem:[%s168 + $0x4] sm:$0xf]
        %v172 = vld [vmem:[%s168 + $0x8] sm:$0xf]
        %v173 = vld [vmem:[%s168 + $0xc] sm:$0xf]
        %v174 = vld [vmem:[%s168 + $0x10] sm:$0xf]
        %v175 = vld [vmem:[%s168 + $0x14] sm:$0xf]
        %v176 = vld [vmem:[%s168 + $0x18] sm:$0xf]
        %v177 = vld [vmem:[%s168 + $0x1c] sm:$0xf]
        %v178 = vld [vmem:[%s1] sm:$0xf]
        %v179 = vld [vmem:[%s2] sm:$0x1]
        %v181 = vlaneseq
        %v182 = vshrl.u32 %v181, 7
        %v183 = vsub.s32 0, %v182
        %v184 = vrot.slane %v179, %v183
        %v194 = vunpack.c.l.b16 %v170
        %v195 = vunpack.c.l.b16 %v171
        %v196 = vunpack.c.l.b16 %v172
        %v197 = vunpack.c.l.b16 %v173
        %v198 = vunpack.c.l.b16 %v174
        %v199 = vunpack.c.l.b16 %v175
        %v200 = vunpack.c.l.b16 %v176
        %v201 = vunpack.c.l.b16 %v177
        %v202 = vpack.c.b16 %v195, %v194
        %v203 = vpack.c.b16 %v197, %v196
        %v204 = vpack.c.b16 %v199, %v198
        %v205 = vpack.c.b16 %v201, %v200
        %vm206 = vcmask 64512
        %v208 = vsel %vm206, %v202, 0
        %v211 = vsel %vm206, %v203, 0
        %v214 = vsel %vm206, %v204, 0
        %v217 = vsel %vm206, %v205, 0
        %vm219 = vcmask 1043456
        %v221 = vsel %vm219, %v178, 0
        %223 = vmatprep.subr.bf16.mxu0 0
        %224 = vmatpush1.bf16.msra.mxu0 %v221
        %225 = vmatprep.subr.bf16.mxu0 0
        %226 = vmatpush1.bf16.msra.mxu0 0
        %227 = vmatprep.subr.bf16.mxu0 0
        %228 = vmatpush1.bf16.msra.mxu0 0
        %229 = vmatprep.subr.bf16.mxu0 0
        %230 = vmatpush1.bf16.msra.mxu0 0
        %231 = vmatprep.subr.bf16.mxu0 0
        %232 = vmatpush1.bf16.msra.mxu0 0
        %233 = vmatprep.subr.bf16.mxu0 0
        %234 = vmatpush1.bf16.msra.mxu0 0
        %235 = vmatprep.subr.bf16.mxu0 0
        %236 = vmatpush1.bf16.msra.mxu0 0
        %237 = vmatprep.subr.bf16.mxu0 0
        %238 = vmatpush1.bf16.msra.mxu0 0
        %239 = vmatprep.subr.bf16.mxu0 0
        %240 = vmatpush1.bf16.msra.mxu0 0
        %241 = vmatprep.subr.bf16.mxu0 0
        %242 = vmatpush1.bf16.msra.mxu0 0
        %243 = vmatprep.subr.bf16.mxu0 0
        %244 = vmatpush1.bf16.msra.mxu0 0
        %245 = vmatprep.subr.bf16.mxu0 0
        %246 = vmatpush1.bf16.msra.mxu0 0
        %247 = vmatprep.subr.bf16.mxu0 0
        %248 = vmatpush1.bf16.msra.mxu0 0
        %249 = vmatprep.subr.bf16.mxu0 0
        %250 = vmatpush1.bf16.msra.mxu0 0
        %251 = vmatprep.subr.bf16.mxu0 0
        %252 = vmatpush1.bf16.msra.mxu0 0
        %253 = vmatprep.subr.bf16.mxu0 0
        %254 = vmatpush1.bf16.msra.mxu0 0
        %255 = vmatprep.mubr.bf16.mxu0 0
        %256 = vmatmul.mubr.bf16.gmra.mrb[0].mxu0 %v208
        %v257 = vpop.f32.mrb[0].mxu0
        %v258 = vadd.f32 %v184, %v257
        %v259 = vpop.f32.mrb[0].mxu0
        %v260 = vpop.f32.mrb[0].mxu0
        %v261 = vadd.f32 %v184, %v260
        %v262 = vpop.f32.mrb[0].mxu0
        %263 = vmatprep.mubr.bf16.mxu0 0
        %264 = vmatmul.mubr.bf16.gmra.mrb[0].mxu0 %v211
        %v265 = vpop.f32.mrb[0].mxu0
        %v266 = vadd.f32 %v184, %v265
        %v267 = vpop.f32.mrb[0].mxu0
        %v268 = vpop.f32.mrb[0].mxu0
        %v269 = vadd.f32 %v184, %v268
        %v270 = vpop.f32.mrb[0].mxu0
        %271 = vmatprep.mubr.bf16.mxu0 0
        %272 = vmatmul.mubr.bf16.gmra.mrb[0].mxu0 %v214
        %v273 = vpop.f32.mrb[0].mxu0
        %v274 = vadd.f32 %v184, %v273
        %v275 = vpop.f32.mrb[0].mxu0
        %v276 = vpop.f32.mrb[0].mxu0
        %v277 = vadd.f32 %v184, %v276
        %v278 = vpop.f32.mrb[0].mxu0
        %279 = vmatprep.mubr.bf16.mxu0 0
        %280 = vmatmul.mubr.bf16.gmra.mrb[0].mxu0 %v217
        %v281 = vpop.f32.mrb[0].mxu0
        %v282 = vadd.f32 %v184, %v281
        %v283 = vpop.f32.mrb[0].mxu0
        %v284 = vpop.f32.mrb[0].mxu0
        %v285 = vadd.f32 %v184, %v284
        %v286 = vpop.f32.mrb[0].mxu0
        %287 = vdwg.mxu0
        %v288 = vpack.c.bf16 %v258, %v258
        %v289 = vpack.c.bf16 %v261, %v261
        %v290 = vpack.c.bf16 %v266, %v266
        %v291 = vpack.c.bf16 %v269, %v269
        %v292 = vpack.c.bf16 %v274, %v274
        %v293 = vpack.c.bf16 %v277, %v277
        %v294 = vpack.c.bf16 %v282, %v282
        %v295 = vpack.c.bf16 %v285, %v285
        %vm296 = vcmask 60416
        %297 = vst.msk [vmem:[%s163] sm:$0xf] %vm296, %v288
        %298 = vst.msk [vmem:[%s163 + $0x8] sm:$0xf] %vm296, %v289
        %299 = vst.msk [vmem:[%s163 + $0x10] sm:$0xf] %vm296, %v290
        %300 = vst.msk [vmem:[%s163 + $0x18] sm:$0xf] %vm296, %v291
        %301 = vst.msk [vmem:[%s163 + $0x20] sm:$0xf] %vm296, %v292
        %302 = vst.msk [vmem:[%s163 + $0x28] sm:$0xf] %vm296, %v293
        %303 = vst.msk [vmem:[%s163 + $0x30] sm:$0xf] %vm296, %v294
        %304 = vst.msk [vmem:[%s163 + $0x38] sm:$0xf] %vm296, %v295
        %s305 = scalar_lea.vmem %s1, 4
        %v306 = vld [vmem:[%s305] sm:$0xf]
        %v307 = vld [vmem:[%s2] sm:$0x1]
        %v309 = vlaneseq
        %v310 = vshrl.u32 %v309, 7
        %v311 = vsub.s32 0, %v310
        %v312 = vrot.slane %v307, %v311
        %v315 = vsel %vm219, %v306, 0
        %317 = vmatprep.subr.bf16.mxu0 0
        %318 = vmatpush1.bf16.msra.mxu0 %v315
        %319 = vmatprep.subr.bf16.mxu0 0
        %320 = vmatpush1.bf16.msra.mxu0 0
        %321 = vmatprep.subr.bf16.mxu0 0
        %322 = vmatpush1.bf16.msra.mxu0 0
        %323 = vmatprep.subr.bf16.mxu0 0
        %324 = vmatpush1.bf16.msra.mxu0 0
        %325 = vmatprep.subr.bf16.mxu0 0
        %326 = vmatpush1.bf16.msra.mxu0 0
        %327 = vmatprep.subr.bf16.mxu0 0
        %328 = vmatpush1.bf16.msra.mxu0 0
        %329 = vmatprep.subr.bf16.mxu0 0
        %330 = vmatpush1.bf16.msra.mxu0 0
        %331 = vmatprep.subr.bf16.mxu0 0
        %332 = vmatpush1.bf16.msra.mxu0 0
        %333 = vmatprep.subr.bf16.mxu0 0
        %334 = vmatpush1.bf16.msra.mxu0 0
        %335 = vmatprep.subr.bf16.mxu0 0
        %336 = vmatpush1.bf16.msra.mxu0 0
        %337 = vmatprep.subr.bf16.mxu0 0
        %338 = vmatpush1.bf16.msra.mxu0 0
        %339 = vmatprep.subr.bf16.mxu0 0
        %340 = vmatpush1.bf16.msra.mxu0 0
        %341 = vmatprep.subr.bf16.mxu0 0
        %342 = vmatpush1.bf16.msra.mxu0 0
        %343 = vmatprep.subr.bf16.mxu0 0
        %344 = vmatpush1.bf16.msra.mxu0 0
        %345 = vmatprep.subr.bf16.mxu0 0
        %346 = vmatpush1.bf16.msra.mxu0 0
        %347 = vmatprep.subr.bf16.mxu0 0
        %348 = vmatpush1.bf16.msra.mxu0 0
        %349 = vmatprep.mubr.bf16.mxu0 0
        %350 = vmatmul.mubr.bf16.gmra.mrb[0].mxu0 %v208
        %v351 = vpop.f32.mrb[0].mxu0
        %v352 = vadd.f32 %v312, %v351
        %v353 = vpop.f32.mrb[0].mxu0
        %v354 = vpop.f32.mrb[0].mxu0
        %v355 = vadd.f32 %v312, %v354
        %v356 = vpop.f32.mrb[0].mxu0
        %357 = vmatprep.mubr.bf16.mxu0 0
        %358 = vmatmul.mubr.bf16.gmra.mrb[0].mxu0 %v211
        %v359 = vpop.f32.mrb[0].mxu0
        %v360 = vadd.f32 %v312, %v359
        %v361 = vpop.f32.mrb[0].mxu0
        %v362 = vpop.f32.mrb[0].mxu0
        %v363 = vadd.f32 %v312, %v362
        %v364 = vpop.f32.mrb[0].mxu0
        %365 = vmatprep.mubr.bf16.mxu0 0
        %366 = vmatmul.mubr.bf16.gmra.mrb[0].mxu0 %v214
        %v367 = vpop.f32.mrb[0].mxu0
        %v368 = vadd.f32 %v312, %v367
        %v369 = vpop.f32.mrb[0].mxu0
        %v370 = vpop.f32.mrb[0].mxu0
        %v371 = vadd.f32 %v312, %v370
        %v372 = vpop.f32.mrb[0].mxu0
        %373 = vmatprep.mubr.bf16.mxu0 0
        %374 = vmatmul.mubr.bf16.gmra.mrb[0].mxu0 %v217
        %v375 = vpop.f32.mrb[0].mxu0
        %v376 = vadd.f32 %v312, %v375
        %v377 = vpop.f32.mrb[0].mxu0
        %v378 = vpop.f32.mrb[0].mxu0
        %v379 = vadd.f32 %v312, %v378
        %v380 = vpop.f32.mrb[0].mxu0
        %381 = vdwg.mxu0
        %v382 = vpack.c.bf16 %v352, %v352
        %v383 = vpack.c.bf16 %v355, %v355
        %v384 = vpack.c.bf16 %v360, %v360
        %v385 = vpack.c.bf16 %v363, %v363
        %v386 = vpack.c.bf16 %v368, %v368
        %v387 = vpack.c.bf16 %v371, %v371
        %v388 = vpack.c.bf16 %v376, %v376
        %v389 = vpack.c.bf16 %v379, %v379
        %s390 = scalar_lea.vmem %s163, 4 [#allocation2]
        %391 = vst.msk [vmem:[%s390] sm:$0xf] %vm296, %v382
        %392 = vst.msk [vmem:[%s390 + $0x8] sm:$0xf] %vm296, %v383
        %393 = vst.msk [vmem:[%s390 + $0x10] sm:$0xf] %vm296, %v384
        %394 = vst.msk [vmem:[%s390 + $0x18] sm:$0xf] %vm296, %v385
        %395 = vst.msk [vmem:[%s390 + $0x20] sm:$0xf] %vm296, %v386
        %396 = vst.msk [vmem:[%s390 + $0x28] sm:$0xf] %vm296, %v387
        %397 = vst.msk [vmem:[%s390 + $0x30] sm:$0xf] %vm296, %v388
        %398 = vst.msk [vmem:[%s390 + $0x38] sm:$0xf] %vm296, %v389
        %s399 = sand.u32 %s93, 1
        %s400 = scalar_lea.sflag [#allocation3], %s399
        %s401 = sand.u32 %s93, 1
        %s402 = smul.addr %s401, 64
        %s403 = scalar_lea.vmem [#allocation2], %s402
        // Predicated region
        $region33: #{tpu_custom_call.1} parent=31 // pred_check
          %p404 = pneg %p103
        $region34: #{tpu_custom_call.1} parent=31 // pred_check_branch
          %406 = sbr.rel (%p404) target = $region36
        $region35: #{tpu_custom_call.1} parent=31 // pred_region
          %s408 = ssub.s32 1024, 1024
          %409 = vsyncadd %s400, %s408
          %s410 = smul.addr %s17, 16
          %s411 = smul.addr %s410, 64
          %s412 = scalar_lea.hbm %s3, %s411
          %s413 = sshll.u32 %s403, 4
          %s414 = int_to_ptr.vmem [resolvable:$true] %s413
          %419 = dma.vmem_to_hbm [thread:$0]  %s414, 1024, %s412, %s400, 64, 64, 4
        $region36: #{tpu_custom_call.1} parent=31 // pred_fallthru
          _
      $region32: #{tpu_custom_call.1} parent=5 // pred_fallthru
        _
      %p420 = scmp.le.s32.totalorder 2, %s12
      // Predicated region
      $region37: #{tpu_custom_call.1} parent=5 // pred_check
        %p421 = pneg %p420
      $region38: #{tpu_custom_call.1} parent=5 // pred_check_branch
        %423 = sbr.rel (%p421) target = $region40
      $region39: #{tpu_custom_call.1} parent=5 // pred_region
        %s424 = ssub.s32 %s12, 2
        // Predicated region
        $region41: #{tpu_custom_call.1} parent=39 // pred_check
          %p425 = pneg %p109
        $region42: #{tpu_custom_call.1} parent=39 // pred_check_branch
          %427 = sbr.rel (%p425) target = $region44
        $region43: #{tpu_custom_call.1} parent=39 // pred_region
          %s428 = sand.u32 %s94, 1
          %s429 = scalar_lea.sflag [#allocation3], %s428
          %s430 = sand.u32 %s94, 1
          %s431 = smul.addr %s430, 64
          %s432 = scalar_lea.vmem [#allocation2], %s431
          %433 = dma.done %s429, 1024
        $region44: #{tpu_custom_call.1} parent=39 // pred_fallthru
          _
      $region40: #{tpu_custom_call.1} parent=5 // pred_fallthru
        _
    $region6: #{tpu_custom_call.1} parent=1 // loop_footer
      %s16 = sadd.s32 1, %s12
    $region7: #{tpu_custom_call.1} parent=1 // loop_footer_branch
      %11 = sbr.rel target = $region3
    $region8: #{tpu_custom_call.1} parent=1 // loop_exit
      _
    %434 = vsyncpa [#allocation3], 1
    %s435 = scalar_lea.sflag [#allocation3], 1
    %436 = vsyncpa %s435, 1

</llo_original>
